<compile_context>
chip_gen: v7x
topology: tpu7x:2x2x1
jax: 0.10.0
libtpu: 0.0.40
codegen_flags: <defaults>
</compile_context>

<pallas_src>
from functools import partial

import numpy as np
import jax
import jax.numpy as jnp
from jax.experimental import pallas as pl
from jax.experimental.pallas import tpu as pltpu

EPS = 1e-5
HIGH = jax.lax.Precision.HIGHEST          # reference only
VMEM_LIMIT = 48 * 1024 * 1024             # below v7x 64 MiB physical, above defaults


def _round_up(a, b):
    return (a + b - 1) // b * b


# ---------------------------------------------------------------------------
# Pallas kernels
# ---------------------------------------------------------------------------
def _stage1_kernel(p1_ref, hpos_ref, wpos_ref, kh_ref, kw_ref,
                   sc1_ref, sh1_ref, w1_ref, b1_ref, act1_ref, *, H, W):
    """BN1 + ReLU6 + pad-mask + 3x3/stride-2 conv (BN2 folded) + ReLU6."""
    # BN1 + ReLU6 on the gathered patches (f32 elementwise).
    a = jnp.clip(p1_ref[...] * sc1_ref[...] + sh1_ref[...], 0.0, 6.0)
    # Zero the taps that fall in the conv zero-padding region (the conv pads
    # the *post-activation* tensor).  h/w come from tiny per-row (M,1) and
    # per-tap (1,9C) int tables -> no (M, 9C) mask tensor in HBM.
    h = hpos_ref[...] + kh_ref[...]                # (m_blk,1)+(1,9C) -> (m_blk,9C)
    w = wpos_ref[...] + kw_ref[...]
    valid = (h >= 0) & (h < H) & (w >= 0) & (w < W)
    a = jnp.where(valid, a, 0.0)
    # im2col matmul on the MXU: bf16 operands, f32 accumulation.  BN2 is folded
    # into w1/b1 on the host, so only ReLU6 remains afterwards.
    out = jnp.dot(a.astype(jnp.bfloat16), w1_ref[...],
                  preferred_element_type=jnp.float32) + b1_ref[...]
    act1_ref[...] = jnp.clip(out, 0.0, 6.0).astype(act1_ref.dtype)


def _stage2_kernel(a0_ref, a1_ref, a2_ref, xs_ref, w2_ref, wr_ref, b_ref, out_ref):
    """3x3/stride-1 conv as 9 shifted matmuls + 1x1/stride-2 residual + biases."""
    wo = out_ref.shape[2]
    c2 = out_ref.shape[3]
    rows = (a0_ref[0, 0], a1_ref[0, 0], a2_ref[0, 0])      # each (Wo+2, C2) bf16
    acc = jnp.zeros((wo, c2), jnp.float32)
    for kh in range(3):
        r = rows[kh]
        for kw in range(3):
            # Multiply the full padded row, then shift-add the f32 result
            # (avoids slicing packed bf16 operands).
            p = jnp.dot(r, w2_ref[3 * kh + kw],
                        preferred_element_type=jnp.float32)  # (Wo+2, C2)
            acc = acc + p[kw:kw + wo, :]
    # Residual branch recomputed here: the (M, 2C) residual never hits HBM.
    acc = acc + jnp.dot(xs_ref[0, 0], wr_ref[...],
                        preferred_element_type=jnp.float32)
    out_ref[...] = (acc + b_ref[...]).astype(out_ref.dtype)[None, None]


# ---------------------------------------------------------------------------
# Plain-JAX glue
# ---------------------------------------------------------------------------
def _im2col(x_nhwc, ksize, stride, pad):
    """Zero-padded patch extraction -> ((N*Ho*Wo, k*k*C), (Ho, Wo))."""
    N, H, W, C = x_nhwc.shape
    xp = jnp.pad(x_nhwc, ((0, 0), (pad, pad), (pad, pad), (0, 0)))
    Ho = (H + 2 * pad - ksize) // stride + 1
    Wo = (W + 2 * pad - ksize) // stride + 1
    taps = []
    for kh in range(ksize):
        for kw in range(ksize):
            taps.append(xp[:, kh:kh + stride * Ho:stride,
                           kw:kw + stride * Wo:stride, :])
    patches = jnp.stack(taps, axis=3)              # (N, Ho, Wo, k*k, C)
    return patches.reshape(N * Ho * Wo, ksize * ksize * C), (Ho, Wo)


def init_params(key, c_in):
    c2 = 2 * c_in
    ks = jax.random.split(key, 12)
    p = {
        "g1": jax.random.normal(ks[0], (c_in,)) * 0.2 + 1.0,
        "b1": jax.random.normal(ks[1], (c_in,)) * 0.1,
        "m1": jax.random.normal(ks[2], (c_in,)) * 0.1,
        "v1": jax.random.uniform(ks[3], (c_in,), minval=0.5, maxval=1.5),
        "g2": jax.random.normal(ks[4], (c2,)) * 0.2 + 1.0,
        "b2": jax.random.normal(ks[5], (c2,)) * 0.1,
        "m2": jax.random.normal(ks[6], (c2,)) * 0.1,
        "v2": jax.random.uniform(ks[7], (c2,), minval=0.5, maxval=1.5),
        "w1": jax.random.normal(ks[8], (c2, c_in, 3, 3)) * 0.1,
        "cb1": jax.random.normal(ks[9], (c2,)) * 0.1,
        "w2": jax.random.normal(ks[10], (c2, c2, 3, 3)) * 0.1,
        "cb2": jax.random.normal(ks[11], (c2,)) * 0.1,
        "wr": jax.random.normal(jax.random.fold_in(key, 100), (c2, c_in, 1, 1)) * 0.1,
        "cbr": jax.random.normal(jax.random.fold_in(key, 101), (c2,)) * 0.1,
    }
    return {k: v.astype(jnp.float32) for k, v in p.items()}


def downsample_residual_block(x_nchw, params, m_block=512):
    N, C, H, W = x_nchw.shape
    C2 = 2 * C
    x = jnp.transpose(x_nchw, (0, 2, 3, 1)).astype(jnp.float32)       # NHWC

    # Fold eval-mode BN into per-channel affine (scale, shift).
    sc1 = params["g1"] / jnp.sqrt(params["v1"] + EPS)
    sh1 = params["b1"] - params["m1"] * sc1
    sc2 = params["g2"] / jnp.sqrt(params["v2"] + EPS)
    sh2 = params["b2"] - params["m2"] * sc2

    # ---- stage 1: im2col glue + fused BN1/ReLU6/conv1(+BN2)/ReLU6 ----------
    patches1, (Ho, Wo) = _im2col(x, 3, 2, 1)                          # (M, 9C) f32
    M = N * Ho * Wo

    m_block = max(8, _round_up(min(m_block, _round_up(M, 8)), 8))
    M_pad = _round_up(M, m_block)
    if M_pad != M:
        patches1 = jnp.pad(patches1, ((0, M_pad - M), (0, 0)))

    # Tiny index tables for the in-kernel pad mask.
    m_idx = jnp.arange(M_pad, dtype=jnp.int32)
    oh_i = (m_idx // Wo) % Ho
    ow_i = m_idx % Wo
    hpos = (2 * oh_i - 1)[:, None]                                    # (M_pad, 1)
    wpos = (2 * ow_i - 1)[:, None]
    taps = np.arange(9 * C) // C
    kh_t = jnp.asarray((taps // 3)[None, :], dtype=jnp.int32)         # (1, 9C)
    kw_t = jnp.asarray((taps % 3)[None, :], dtype=jnp.int32)

    # BN1 affine tiled over the 9 taps (patch column order is (kh, kw, c)).
    sc1_t = jnp.tile(sc1, 9)[None, :]
    sh1_t = jnp.tile(sh1, 9)[None, :]

    # conv2dC3S2 weights with BN2 folded in; bf16 MXU operands.
    w1_flat = jnp.transpose(params["w1"], (2, 3, 1, 0)).reshape(9 * C, C2)
    w1_fold = (w1_flat * sc2[None, :]).astype(jnp.bfloat16)
    b1_fold = (params["cb1"] * sc2 + sh2)[None, :]                    # (1, C2) f32

    grid1 = (M_pad // m_block,)
    row = lambda k: pl.BlockSpec((m_block, k), lambda i: (i, 0))
    full = lambda s: pl.BlockSpec(s, lambda i, _s=s: (0,) * len(_s))

    act1 = pl.pallas_call(
        partial(_stage1_kernel, H=H, W=W),
        out_shape=jax.ShapeDtypeStruct((M_pad, C2), jnp.bfloat16),
        grid=grid1,
        in_specs=[
            row(9 * C),            # patches1 (f32)
            row(1),                # hpos (int32)
            row(1),                # wpos (int32)
            full((1, 9 * C)),      # kh per tap-column (int32)
            full((1, 9 * C)),      # kw per tap-column (int32)
            full((1, 9 * C)),      # BN1 scale
            full((1, 9 * C)),      # BN1 shift
            full((9 * C, C2)),     # conv1 weight (BN2 folded, bf16)
            full((1, C2)),         # conv1 bias  (folded, f32)
        ],
        out_specs=pl.BlockSpec((m_block, C2), lambda i: (i, 0)),
        compiler_params=pltpu.CompilerParams(
            dimension_semantics=("parallel",),
            vmem_limit_bytes=VMEM_LIMIT),
    )(patches1, hpos, wpos, kh_t, kw_t, sc1_t, sh1_t, w1_fold, b1_fold)

    # ---- stage 2: pad glue + fused conv2 / residual / biases ---------------
    # act1 back to image layout with a 1-pixel zero ring (cheap ~1.3x copy,
    # replacing the old 9x patches2 materialization).
    act1_p = jnp.pad(act1[:M].reshape(N, Ho, Wo, C2),
                     ((0, 0), (1, 1), (1, 1), (0, 0)))                # bf16
    xs = x[:, ::2, ::2, :].astype(jnp.bfloat16)                       # (N,Ho,Wo,C)
    w2_t = jnp.transpose(params["w2"], (2, 3, 1, 0)).reshape(9, C2, C2)
    w2_t = w2_t.astype(jnp.bfloat16)
    wr_b = params["wr"][:, :, 0, 0].T.astype(jnp.bfloat16)            # (C, C2)
    bias2 = (params["cb2"] + params["cbr"])[None, :]                  # (1, C2) f32

    Wp = Wo + 2
    arow = lambda kh: pl.BlockSpec((1, 1, Wp, C2),
                                   lambda n, i, _kh=kh: (n, i + _kh, 0, 0))

    out_img = pl.pallas_call(
        _stage2_kernel,
        out_shape=jax.ShapeDtypeStruct((N, Ho, Wo, C2), jnp.float32),
        grid=(N, Ho),
        in_specs=[
            arow(0), arow(1), arow(2),                                # shifted act1 rows
            pl.BlockSpec((1, 1, Wo, C), lambda n, i: (n, i, 0, 0)),   # xs (residual rows)
            pl.BlockSpec((9, C2, C2), lambda n, i: (0, 0, 0)),        # conv2 weight
            pl.BlockSpec((C, C2), lambda n, i: (0, 0)),               # residual weight
            pl.BlockSpec((1, C2), lambda n, i: (0, 0)),               # cb2 + cbr
        ],
        out_specs=pl.BlockSpec((1, 1, Wo, C2), lambda n, i: (n, i, 0, 0)),
        compiler_params=pltpu.CompilerParams(
            dimension_semantics=("parallel", "parallel"),
            vmem_limit_bytes=VMEM_LIMIT),
    )(act1_p, act1_p, act1_p, xs, w2_t, wr_b, bias2)

    return jnp.transpose(out_img, (0, 3, 1, 2))                       # NCHW


# ---------------------------------------------------------------------------
# Pure-JAX f32 reference (eval-mode BN, matches the PyTorch forward semantics)
# ---------------------------------------------------------------------------
def reference(x, p):
    def bn(y, g, b, m, v):
        return ((y - m[None, :, None, None])
                / jnp.sqrt(v[None, :, None, None] + EPS)
                * g[None, :, None, None] + b[None, :, None, None])

    def relu6(y):
        return jnp.clip(y, 0.0, 6.0)

    def conv(y, w, b, s, pad):
        o = jax.lax.conv_general_dilated(
            y, w, (s, s), ((pad, pad), (pad, pad)),
            dimension_numbers=("NCHW", "OIHW", "NCHW"), precision=HIGH)
        return o + b[None, :, None, None]

    res = conv(x, p["wr"], p["cbr"], 2, 0)
    out = conv(relu6(bn(x, p["g1"], p["b1"], p["m1"], p["v1"])), p["w1"], p["cb1"], 2, 1)
    out = conv(relu6(bn(out, p["g2"], p["b2"], p["m2"], p["v2"])), p["w2"], p["cb2"], 1, 1)
    return out + res


if __name__ == "__main__":
    key = jax.random.PRNGKey(0)
    kx, kp = jax.random.split(key)

    N, C, H, W = 2, 4, 16, 16
    x = jax.random.normal(kx, (N, C, H, W), dtype=jnp.float32)
    params = init_params(kp, C)

    out = downsample_residual_block(x, params)
    out = jax.block_until_ready(out)

    ref = reference(x, params)
    assert out.shape == (N, 2 * C, H // 2, W // 2), out.shape
    # Kernels use bf16 MXU operands with f32 accumulation -> compare against
    # the f32 reference with a bf16-appropriate tolerance.
    err = float(jnp.max(jnp.abs(out - ref)))
    assert jnp.allclose(out, ref, rtol=5e-2, atol=5e-2), err

    print("KERNEL_OK")
</pallas_src>

<mosaic_0001>
module attributes {stable_mosaic.version = 11 : i64} {
  func.func @_stage1_kernel(%arg0: i32, %arg1: memref<128x36xf32, #tpu.memory_space<vmem>>, %arg2: memref<128x1xi32, #tpu.memory_space<vmem>>, %arg3: memref<128x1xi32, #tpu.memory_space<vmem>>, %arg4: memref<1x36xi32, #tpu.memory_space<vmem>>, %arg5: memref<1x36xi32, #tpu.memory_space<vmem>>, %arg6: memref<1x36xf32, #tpu.memory_space<vmem>>, %arg7: memref<1x36xf32, #tpu.memory_space<vmem>>, %arg8: memref<36x8xbf16, #tpu.memory_space<vmem>>, %arg9: memref<1x8xf32, #tpu.memory_space<vmem>>, %arg10: memref<128x8xbf16, #tpu.memory_space<vmem>>) attributes {dimension_semantics = [#tpu.dimension_semantics<parallel>], iteration_bounds = array<i64: 1>, scalar_prefetch = 0 : i64, scratch_operands = 0 : i64, tpu.core_type = #tpu.core_type<tc>, window_params = [{transform_indices = @transform_0, window_bounds = array<i64: 128, 36>}, {transform_indices = @transform_1, window_bounds = array<i64: 128, 1>}, {transform_indices = @transform_2, window_bounds = array<i64: 128, 1>}, {pipeline_mode = #tpu.pipeline_mode<synchronous>, transform_indices = @transform_3, window_bounds = array<i64: 1, 36>}, {pipeline_mode = #tpu.pipeline_mode<synchronous>, transform_indices = @transform_4, window_bounds = array<i64: 1, 36>}, {pipeline_mode = #tpu.pipeline_mode<synchronous>, transform_indices = @transform_5, window_bounds = array<i64: 1, 36>}, {pipeline_mode = #tpu.pipeline_mode<synchronous>, transform_indices = @transform_6, window_bounds = array<i64: 1, 36>}, {pipeline_mode = #tpu.pipeline_mode<synchronous>, transform_indices = @transform_7, window_bounds = array<i64: 36, 8>}, {pipeline_mode = #tpu.pipeline_mode<synchronous>, transform_indices = @transform_8, window_bounds = array<i64: 1, 8>}, {transform_indices = @transform_9, window_bounds = array<i64: 128, 8>}]} {
    %c0 = arith.constant 0 : index
    %c0_0 = arith.constant 0 : index
    %0 = vector.load %arg1[%c0, %c0_0] : memref<128x36xf32, #tpu.memory_space<vmem>>, vector<128x36xf32>
    %c0_1 = arith.constant 0 : index
    %c0_2 = arith.constant 0 : index
    %1 = vector.load %arg6[%c0_1, %c0_2] : memref<1x36xf32, #tpu.memory_space<vmem>>, vector<1x36xf32>
    %2 = vector.broadcast %1 : vector<1x36xf32> to vector<128x36xf32>
    %3 = arith.mulf %0, %2 : vector<128x36xf32>
    %c0_3 = arith.constant 0 : index
    %c0_4 = arith.constant 0 : index
    %4 = vector.load %arg7[%c0_3, %c0_4] : memref<1x36xf32, #tpu.memory_space<vmem>>, vector<1x36xf32>
    %5 = vector.broadcast %4 : vector<1x36xf32> to vector<128x36xf32>
    %6 = arith.addf %3, %5 : vector<128x36xf32>
    %cst = arith.constant 0.000000e+00 : f32
    %cst_5 = arith.constant 6.000000e+00 : f32
    %7 = vector.broadcast %cst : f32 to vector<128x36xf32>
    %8 = arith.maximumf %7, %6 : vector<128x36xf32>
    %9 = vector.broadcast %cst_5 : f32 to vector<128x36xf32>
    %10 = arith.minimumf %9, %8 : vector<128x36xf32>
    %c0_6 = arith.constant 0 : index
    %c0_7 = arith.constant 0 : index
    %11 = vector.load %arg2[%c0_6, %c0_7] : memref<128x1xi32, #tpu.memory_space<vmem>>, vector<128x1xi32>
    %c0_8 = arith.constant 0 : index
    %c0_9 = arith.constant 0 : index
    %12 = vector.load %arg4[%c0_8, %c0_9] : memref<1x36xi32, #tpu.memory_space<vmem>>, vector<1x36xi32>
    %13 = vector.broadcast %11 : vector<128x1xi32> to vector<128x36xi32>
    %14 = vector.broadcast %12 : vector<1x36xi32> to vector<128x36xi32>
    %15 = arith.addi %13, %14 : vector<128x36xi32>
    %c0_10 = arith.constant 0 : index
    %c0_11 = arith.constant 0 : index
    %16 = vector.load %arg3[%c0_10, %c0_11] : memref<128x1xi32, #tpu.memory_space<vmem>>, vector<128x1xi32>
    %c0_12 = arith.constant 0 : index
    %c0_13 = arith.constant 0 : index
    %17 = vector.load %arg5[%c0_12, %c0_13] : memref<1x36xi32, #tpu.memory_space<vmem>>, vector<1x36xi32>
    %18 = vector.broadcast %16 : vector<128x1xi32> to vector<128x36xi32>
    %19 = vector.broadcast %17 : vector<1x36xi32> to vector<128x36xi32>
    %20 = arith.addi %18, %19 : vector<128x36xi32>
    %c0_i32 = arith.constant 0 : i32
    %21 = vector.broadcast %c0_i32 : i32 to vector<128x36xi32>
    %22 = arith.cmpi sge, %15, %21 : vector<128x36xi32>
    %c16_i32 = arith.constant 16 : i32
    %23 = vector.broadcast %c16_i32 : i32 to vector<128x36xi32>
    %24 = arith.cmpi slt, %15, %23 : vector<128x36xi32>
    %25 = arith.andi %22, %24 : vector<128x36xi1>
    %c0_i32_14 = arith.constant 0 : i32
    %26 = vector.broadcast %c0_i32_14 : i32 to vector<128x36xi32>
    %27 = arith.cmpi sge, %20, %26 : vector<128x36xi32>
    %28 = arith.andi %25, %27 : vector<128x36xi1>
    %c16_i32_15 = arith.constant 16 : i32
    %29 = vector.broadcast %c16_i32_15 : i32 to vector<128x36xi32>
    %30 = arith.cmpi slt, %20, %29 : vector<128x36xi32>
    %31 = arith.andi %28, %30 : vector<128x36xi1>
    %cst_16 = arith.constant 0.000000e+00 : f32
    %32 = vector.broadcast %cst_16 : f32 to vector<128x36xf32>
    %33 = arith.select %31, %10, %32 : vector<128x36xi1>, vector<128x36xf32>
    %34 = arith.truncf %33 : vector<128x36xf32> to vector<128x36xbf16>
    %c0_17 = arith.constant 0 : index
    %c0_18 = arith.constant 0 : index
    %35 = vector.load %arg8[%c0_17, %c0_18] : memref<36x8xbf16, #tpu.memory_space<vmem>>, vector<36x8xbf16>
    %cst_19 = arith.constant dense<0.000000e+00> : vector<128x8xf32>
    %36 = tpu.matmul %34, %35, %cst_19 {dimension_numbers = #tpu.dot_dimension_numbers<[1], [0], [0], [1], [0, 0, 1, 1], [], []>} : vector<128x36xbf16>, vector<36x8xbf16>, vector<128x8xf32> -> vector<128x8xf32>
    %c0_20 = arith.constant 0 : index
    %c0_21 = arith.constant 0 : index
    %37 = vector.load %arg9[%c0_20, %c0_21] : memref<1x8xf32, #tpu.memory_space<vmem>>, vector<1x8xf32>
    %38 = vector.broadcast %37 : vector<1x8xf32> to vector<128x8xf32>
    %39 = arith.addf %36, %38 : vector<128x8xf32>
    %cst_22 = arith.constant 0.000000e+00 : f32
    %cst_23 = arith.constant 6.000000e+00 : f32
    %40 = vector.broadcast %cst_22 : f32 to vector<128x8xf32>
    %41 = arith.maximumf %40, %39 : vector<128x8xf32>
    %42 = vector.broadcast %cst_23 : f32 to vector<128x8xf32>
    %43 = arith.minimumf %42, %41 : vector<128x8xf32>
    %44 = arith.truncf %43 : vector<128x8xf32> to vector<128x8xbf16>
    %c0_24 = arith.constant 0 : index
    %c0_25 = arith.constant 0 : index
    %45 = vector.load %arg10[%c0_24, %c0_25] : memref<128x8xbf16, #tpu.memory_space<vmem>>, vector<128x8xbf16>
    tpu.vector_store %arg10[%c0_24, %c0_25], %44 {strides = array<i32>} : memref<128x8xbf16, #tpu.memory_space<vmem>>, vector<128x8xbf16>,
    return
  }
  func.func @transform_0(%arg0: i32) -> (i32, i32) {
    %c0_i32 = arith.constant 0 : i32
    %c0_i32_0 = arith.constant 0 : i32
    return %arg0, %c0_i32 : i32, i32
  }
  func.func @transform_1(%arg0: i32) -> (i32, i32) {
    %c0_i32 = arith.constant 0 : i32
    %c0_i32_0 = arith.constant 0 : i32
    return %arg0, %c0_i32 : i32, i32
  }
  func.func @transform_2(%arg0: i32) -> (i32, i32) {
    %c0_i32 = arith.constant 0 : i32
    %c0_i32_0 = arith.constant 0 : i32
    return %arg0, %c0_i32 : i32, i32
  }
  func.func @transform_3(%arg0: i32) -> (i32, i32) {
    %c0_i32 = arith.constant 0 : i32
    %c0_i32_0 = arith.constant 0 : i32
    %c0_i32_1 = arith.constant 0 : i32
    return %c0_i32, %c0_i32_0 : i32, i32
  }
  func.func @transform_4(%arg0: i32) -> (i32, i32) {
    %c0_i32 = arith.constant 0 : i32
    %c0_i32_0 = arith.constant 0 : i32
    %c0_i32_1 = arith.constant 0 : i32
    return %c0_i32, %c0_i32_0 : i32, i32
  }
  func.func @transform_5(%arg0: i32) -> (i32, i32) {
    %c0_i32 = arith.constant 0 : i32
    %c0_i32_0 = arith.constant 0 : i32
    %c0_i32_1 = arith.constant 0 : i32
    return %c0_i32, %c0_i32_0 : i32, i32
  }
  func.func @transform_6(%arg0: i32) -> (i32, i32) {
    %c0_i32 = arith.constant 0 : i32
    %c0_i32_0 = arith.constant 0 : i32
    %c0_i32_1 = arith.constant 0 : i32
    return %c0_i32, %c0_i32_0 : i32, i32
  }
  func.func @transform_7(%arg0: i32) -> (i32, i32) {
    %c0_i32 = arith.constant 0 : i32
    %c0_i32_0 = arith.constant 0 : i32
    %c0_i32_1 = arith.constant 0 : i32
    return %c0_i32, %c0_i32_0 : i32, i32
  }
  func.func @transform_8(%arg0: i32) -> (i32, i32) {
    %c0_i32 = arith.constant 0 : i32
    %c0_i32_0 = arith.constant 0 : i32
    %c0_i32_1 = arith.constant 0 : i32
    return %c0_i32, %c0_i32_0 : i32, i32
  }
  func.func @transform_9(%arg0: i32) -> (i32, i32) {
    %c0_i32 = arith.constant 0 : i32
    %c0_i32_0 = arith.constant 0 : i32
    return %arg0, %c0_i32 : i32, i32
  }
}

</mosaic_0001>

<llo_original>
// kernel: tpu_custom_call.1
$region0: #{tpu_custom_call.1}
  #allocation0 [shape = 'u32[]', space=smem, size = 0x4, offset = 0x4, fixed_abs, tag = 'smem constant byte address 0x4 - core index']
  #allocation1 [shape = 'u32[144,128]{1,0:T(1,128)}', space=vmem, size = 0x12000, scoped, tag = 'internal scratch']
  %s0 = inlined_call_operand.vmem [shape: f32[128,36], index: 0, kind: input, shape index: {}]
  %s1 = inlined_call_operand.vmem [shape: s32[128,1], index: 1, kind: input, shape index: {}]
  %s2 = inlined_call_operand.vmem [shape: s32[128,1], index: 2, kind: input, shape index: {}]
  %s3 = inlined_call_operand.vmem [shape: s32[1,36], index: 3, kind: input, shape index: {}]
  %s4 = inlined_call_operand.vmem [shape: s32[1,36], index: 4, kind: input, shape index: {}]
  %s5 = inlined_call_operand.vmem [shape: f32[1,36], index: 5, kind: input, shape index: {}]
  %s6 = inlined_call_operand.vmem [shape: f32[1,36], index: 6, kind: input, shape index: {}]
  %s7 = inlined_call_operand.vmem [shape: bf16[36,8], index: 7, kind: input, shape index: {}]
  %s8 = inlined_call_operand.vmem [shape: f32[1,8], index: 8, kind: input, shape index: {}]
  %s9 = inlined_call_operand.vmem [shape: bf16[128,8], index: 9, kind: output, shape index: {}]
  %s10 = sld [smem:[#allocation0]]
  $region46: #{tpu_custom_call.1} parent=0
    _
  %s12 = ssub.s32 1, %s10
  %s13 = scalar_select 0, %s12, %s10
  // Predicated region
  $region2: #{tpu_custom_call.1} parent=0 // pred_check
    _
  $region3: #{tpu_custom_call.1} parent=0 // pred_check_branch
    %15 = sbr.rel (0) target = $region5
  $region4: #{tpu_custom_call.1} parent=0 // pred_region
    _
  $region5: #{tpu_custom_call.1} parent=0 // pred_fallthru
    _
  // Predicated region
  $region6: #{tpu_custom_call.1} parent=0 // pred_check
    _
  $region7: #{tpu_custom_call.1} parent=0 // pred_check_branch
    %17 = sbr.rel (0) target = $region9
  $region8: #{tpu_custom_call.1} parent=0 // pred_region
    _
  $region9: #{tpu_custom_call.1} parent=0 // pred_fallthru
    _
  // Predicated region
  $region10: #{tpu_custom_call.1} parent=0 // pred_check
    _
  $region11: #{tpu_custom_call.1} parent=0 // pred_check_branch
    %19 = sbr.rel (0) target = $region13
  $region12: #{tpu_custom_call.1} parent=0 // pred_region
    _
  $region13: #{tpu_custom_call.1} parent=0 // pred_fallthru
    _
  // Predicated region
  $region14: #{tpu_custom_call.1} parent=0 // pred_check
    _
  $region15: #{tpu_custom_call.1} parent=0 // pred_check_branch
    %21 = sbr.rel (0) target = $region17
  $region16: #{tpu_custom_call.1} parent=0 // pred_region
    _
  $region17: #{tpu_custom_call.1} parent=0 // pred_fallthru
    _
  // Predicated region
  $region18: #{tpu_custom_call.1} parent=0 // pred_check
    _
  $region19: #{tpu_custom_call.1} parent=0 // pred_check_branch
    %23 = sbr.rel (0) target = $region21
  $region20: #{tpu_custom_call.1} parent=0 // pred_region
    _
  $region21: #{tpu_custom_call.1} parent=0 // pred_fallthru
    _
  // Predicated region
  $region22: #{tpu_custom_call.1} parent=0 // pred_check
    _
  $region23: #{tpu_custom_call.1} parent=0 // pred_check_branch
    %25 = sbr.rel (0) target = $region25
  $region24: #{tpu_custom_call.1} parent=0 // pred_region
    _
  $region25: #{tpu_custom_call.1} parent=0 // pred_fallthru
    _
  // Predicated region
  $region26: #{tpu_custom_call.1} parent=0 // pred_check
    _
  $region27: #{tpu_custom_call.1} parent=0 // pred_check_branch
    %27 = sbr.rel (0) target = $region29
  $region28: #{tpu_custom_call.1} parent=0 // pred_region
    _
  $region29: #{tpu_custom_call.1} parent=0 // pred_fallthru
    _
  // Predicated region
  $region30: #{tpu_custom_call.1} parent=0 // pred_check
    _
  $region31: #{tpu_custom_call.1} parent=0 // pred_check_branch
    %29 = sbr.rel (0) target = $region33
  $region32: #{tpu_custom_call.1} parent=0 // pred_region
    _
  $region33: #{tpu_custom_call.1} parent=0 // pred_fallthru
    _
  // Predicated region
  $region34: #{tpu_custom_call.1} parent=0 // pred_check
    _
  $region35: #{tpu_custom_call.1} parent=0 // pred_check_branch
    %31 = sbr.rel (0) target = $region37
  $region36: #{tpu_custom_call.1} parent=0 // pred_region
    _
  $region37: #{tpu_custom_call.1} parent=0 // pred_fallthru
    _
  %v33 = vld [vmem:[%s0] sm:$0xff]
  %v34 = vld [vmem:[%s0 + $0x8] sm:$0xff]
  %v35 = vld [vmem:[%s0 + $0x10] sm:$0xff]
  %v36 = vld [vmem:[%s0 + $0x18] sm:$0xff]
  %v37 = vld [vmem:[%s0 + $0x20] sm:$0xff]
  %v38 = vld [vmem:[%s0 + $0x28] sm:$0xff]
  %v39 = vld [vmem:[%s0 + $0x30] sm:$0xff]
  %v40 = vld [vmem:[%s0 + $0x38] sm:$0xff]
  %v41 = vld [vmem:[%s0 + $0x40] sm:$0xff]
  %v42 = vld [vmem:[%s0 + $0x48] sm:$0xff]
  %v43 = vld [vmem:[%s0 + $0x50] sm:$0xff]
  %v44 = vld [vmem:[%s0 + $0x58] sm:$0xff]
  %v45 = vld [vmem:[%s0 + $0x60] sm:$0xff]
  %v46 = vld [vmem:[%s0 + $0x68] sm:$0xff]
  %v47 = vld [vmem:[%s0 + $0x70] sm:$0xff]
  %v48 = vld [vmem:[%s0 + $0x78] sm:$0xff]
  %v49 = vld [vmem:[%s5] sm:$0x1]
  %v51 = vlaneseq
  %v52 = vshrl.u32 %v51, 7
  %v53 = vsub.s32 0, %v52
  %v54 = vrot.slane %v49, %v53
  %v56 = vmul.f32 %v33, %v54
  %v57 = vmul.f32 %v34, %v54
  %v58 = vmul.f32 %v35, %v54
  %v59 = vmul.f32 %v36, %v54
  %v60 = vmul.f32 %v37, %v54
  %v61 = vmul.f32 %v38, %v54
  %v62 = vmul.f32 %v39, %v54
  %v63 = vmul.f32 %v40, %v54
  %v64 = vmul.f32 %v41, %v54
  %v65 = vmul.f32 %v42, %v54
  %v66 = vmul.f32 %v43, %v54
  %v67 = vmul.f32 %v44, %v54
  %v68 = vmul.f32 %v45, %v54
  %v69 = vmul.f32 %v46, %v54
  %v70 = vmul.f32 %v47, %v54
  %v71 = vmul.f32 %v48, %v54
  %v72 = vld [vmem:[%s6] sm:$0x1]
  %v74 = vlaneseq
  %v75 = vshrl.u32 %v74, 7
  %v76 = vsub.s32 0, %v75
  %v77 = vrot.slane %v72, %v76
  %v79 = vadd.f32 %v56, %v77
  %v80 = vadd.f32 %v57, %v77
  %v81 = vadd.f32 %v58, %v77
  %v82 = vadd.f32 %v59, %v77
  %v83 = vadd.f32 %v60, %v77
  %v84 = vadd.f32 %v61, %v77
  %v85 = vadd.f32 %v62, %v77
  %v86 = vadd.f32 %v63, %v77
  %v87 = vadd.f32 %v64, %v77
  %v88 = vadd.f32 %v65, %v77
  %v89 = vadd.f32 %v66, %v77
  %v90 = vadd.f32 %v67, %v77
  %v91 = vadd.f32 %v68, %v77
  %v92 = vadd.f32 %v69, %v77
  %v93 = vadd.f32 %v70, %v77
  %v94 = vadd.f32 %v71, %v77
  %v95 = vmax.f32 %v79, 0.0
  %v96 = vmax.f32 %v80, 0.0
  %v97 = vmax.f32 %v81, 0.0
  %v98 = vmax.f32 %v82, 0.0
  %v99 = vmax.f32 %v83, 0.0
  %v100 = vmax.f32 %v84, 0.0
  %v101 = vmax.f32 %v85, 0.0
  %v102 = vmax.f32 %v86, 0.0
  %v103 = vmax.f32 %v87, 0.0
  %v104 = vmax.f32 %v88, 0.0
  %v105 = vmax.f32 %v89, 0.0
  %v106 = vmax.f32 %v90, 0.0
  %v107 = vmax.f32 %v91, 0.0
  %v108 = vmax.f32 %v92, 0.0
  %v109 = vmax.f32 %v93, 0.0
  %v110 = vmax.f32 %v94, 0.0
  %v111 = vmin.f32 %v95, 6.0
  %v112 = vmin.f32 %v96, 6.0
  %v113 = vmin.f32 %v97, 6.0
  %v114 = vmin.f32 %v98, 6.0
  %v115 = vmin.f32 %v99, 6.0
  %v116 = vmin.f32 %v100, 6.0
  %v117 = vmin.f32 %v101, 6.0
  %v118 = vmin.f32 %v102, 6.0
  %v119 = vmin.f32 %v103, 6.0
  %v120 = vmin.f32 %v104, 6.0
  %v121 = vmin.f32 %v105, 6.0
  %v122 = vmin.f32 %v106, 6.0
  %v123 = vmin.f32 %v107, 6.0
  %v124 = vmin.f32 %v108, 6.0
  %v125 = vmin.f32 %v109, 6.0
  %v126 = vmin.f32 %v110, 6.0
  %v127 = vld [vmem:[%s1] sm:$0xff]
  %v128 = vld [vmem:[%s1 + $0x8] sm:$0xff]
  %v129 = vld [vmem:[%s1 + $0x10] sm:$0xff]
  %v130 = vld [vmem:[%s1 + $0x18] sm:$0xff]
  %v131 = vld [vmem:[%s1 + $0x20] sm:$0xff]
  %v132 = vld [vmem:[%s1 + $0x28] sm:$0xff]
  %v133 = vld [vmem:[%s1 + $0x30] sm:$0xff]
  %v134 = vld [vmem:[%s1 + $0x38] sm:$0xff]
  %v135 = vld [vmem:[%s1 + $0x40] sm:$0xff]
  %v136 = vld [vmem:[%s1 + $0x48] sm:$0xff]
  %v137 = vld [vmem:[%s1 + $0x50] sm:$0xff]
  %v138 = vld [vmem:[%s1 + $0x58] sm:$0xff]
  %v139 = vld [vmem:[%s1 + $0x60] sm:$0xff]
  %v140 = vld [vmem:[%s1 + $0x68] sm:$0xff]
  %v141 = vld [vmem:[%s1 + $0x70] sm:$0xff]
  %v142 = vld [vmem:[%s1 + $0x78] sm:$0xff]
  %v143 = vld [vmem:[%s3] sm:$0x1]
  %144 = vset.pattern.permute.xlu0 0
  %145 = vperm.xlu0 %144, %v127
  %v146 = vpop.permute.xlu0 %145
  %147 = vset.pattern.permute.xlu0 0
  %148 = vperm.xlu0 %147, %v128
  %v149 = vpop.permute.xlu0 %148
  %150 = vset.pattern.permute.xlu0 0
  %151 = vperm.xlu0 %150, %v129
  %v152 = vpop.permute.xlu0 %151
  %153 = vset.pattern.permute.xlu0 0
  %154 = vperm.xlu0 %153, %v130
  %v155 = vpop.permute.xlu0 %154
  %156 = vset.pattern.permute.xlu0 0
  %157 = vperm.xlu0 %156, %v131
  %v158 = vpop.permute.xlu0 %157
  %159 = vset.pattern.permute.xlu0 0
  %160 = vperm.xlu0 %159, %v132
  %v161 = vpop.permute.xlu0 %160
  %162 = vset.pattern.permute.xlu0 0
  %163 = vperm.xlu0 %162, %v133
  %v164 = vpop.permute.xlu0 %163
  %165 = vset.pattern.permute.xlu0 0
  %166 = vperm.xlu0 %165, %v134
  %v167 = vpop.permute.xlu0 %166
  %168 = vset.pattern.permute.xlu0 0
  %169 = vperm.xlu0 %168, %v135
  %v170 = vpop.permute.xlu0 %169
  %171 = vset.pattern.permute.xlu0 0
  %172 = vperm.xlu0 %171, %v136
  %v173 = vpop.permute.xlu0 %172
  %174 = vset.pattern.permute.xlu0 0
  %175 = vperm.xlu0 %174, %v137
  %v176 = vpop.permute.xlu0 %175
  %177 = vset.pattern.permute.xlu0 0
  %178 = vperm.xlu0 %177, %v138
  %v179 = vpop.permute.xlu0 %178
  %180 = vset.pattern.permute.xlu0 0
  %181 = vperm.xlu0 %180, %v139
  %v182 = vpop.permute.xlu0 %181
  %183 = vset.pattern.permute.xlu0 0
  %184 = vperm.xlu0 %183, %v140
  %v185 = vpop.permute.xlu0 %184
  %186 = vset.pattern.permute.xlu0 0
  %187 = vperm.xlu0 %186, %v141
  %v188 = vpop.permute.xlu0 %187
  %189 = vset.pattern.permute.xlu0 0
  %190 = vperm.xlu0 %189, %v142
  %v191 = vpop.permute.xlu0 %190
  %v192 = vlaneseq
  %v193 = vshrl.u32 %v192, 7
  %v194 = vsub.s32 0, %v193
  %v195 = vrot.slane %v143, %v194
  %v196 = vadd.s32 %v146, %v195
  %v197 = vadd.s32 %v149, %v195
  %v198 = vadd.s32 %v152, %v195
  %v199 = vadd.s32 %v155, %v195
  %v200 = vadd.s32 %v158, %v195
  %v201 = vadd.s32 %v161, %v195
  %v202 = vadd.s32 %v164, %v195
  %v203 = vadd.s32 %v167, %v195
  %v204 = vadd.s32 %v170, %v195
  %v205 = vadd.s32 %v173, %v195
  %v206 = vadd.s32 %v176, %v195
  %v207 = vadd.s32 %v179, %v195
  %v208 = vadd.s32 %v182, %v195
  %v209 = vadd.s32 %v185, %v195
  %v210 = vadd.s32 %v188, %v195
  %v211 = vadd.s32 %v191, %v195
  %v212 = vld [vmem:[%s2] sm:$0xff]
  %v213 = vld [vmem:[%s2 + $0x8] sm:$0xff]
  %v214 = vld [vmem:[%s2 + $0x10] sm:$0xff]
  %v215 = vld [vmem:[%s2 + $0x18] sm:$0xff]
  %v216 = vld [vmem:[%s2 + $0x20] sm:$0xff]
  %v217 = vld [vmem:[%s2 + $0x28] sm:$0xff]
  %v218 = vld [vmem:[%s2 + $0x30] sm:$0xff]
  %v219 = vld [vmem:[%s2 + $0x38] sm:$0xff]
  %v220 = vld [vmem:[%s2 + $0x40] sm:$0xff]
  %v221 = vld [vmem:[%s2 + $0x48] sm:$0xff]
  %v222 = vld [vmem:[%s2 + $0x50] sm:$0xff]
  %v223 = vld [vmem:[%s2 + $0x58] sm:$0xff]
  %v224 = vld [vmem:[%s2 + $0x60] sm:$0xff]
  %v225 = vld [vmem:[%s2 + $0x68] sm:$0xff]
  %v226 = vld [vmem:[%s2 + $0x70] sm:$0xff]
  %v227 = vld [vmem:[%s2 + $0x78] sm:$0xff]
  %v228 = vld [vmem:[%s4] sm:$0x1]
  %229 = vset.pattern.permute.xlu0 0
  %230 = vperm.xlu0 %229, %v212
  %v231 = vpop.permute.xlu0 %230
  %232 = vset.pattern.permute.xlu0 0
  %233 = vperm.xlu0 %232, %v213
  %v234 = vpop.permute.xlu0 %233
  %235 = vset.pattern.permute.xlu0 0
  %236 = vperm.xlu0 %235, %v214
  %v237 = vpop.permute.xlu0 %236
  %238 = vset.pattern.permute.xlu0 0
  %239 = vperm.xlu0 %238, %v215
  %v240 = vpop.permute.xlu0 %239
  %241 = vset.pattern.permute.xlu0 0
  %242 = vperm.xlu0 %241, %v216
  %v243 = vpop.permute.xlu0 %242
  %244 = vset.pattern.permute.xlu0 0
  %245 = vperm.xlu0 %244, %v217
  %v246 = vpop.permute.xlu0 %245
  %247 = vset.pattern.permute.xlu0 0
  %248 = vperm.xlu0 %247, %v218
  %v249 = vpop.permute.xlu0 %248
  %250 = vset.pattern.permute.xlu0 0
  %251 = vperm.xlu0 %250, %v219
  %v252 = vpop.permute.xlu0 %251
  %253 = vset.pattern.permute.xlu0 0
  %254 = vperm.xlu0 %253, %v220
  %v255 = vpop.permute.xlu0 %254
  %256 = vset.pattern.permute.xlu0 0
  %257 = vperm.xlu0 %256, %v221
  %v258 = vpop.permute.xlu0 %257
  %259 = vset.pattern.permute.xlu0 0
  %260 = vperm.xlu0 %259, %v222
  %v261 = vpop.permute.xlu0 %260
  %262 = vset.pattern.permute.xlu0 0
  %263 = vperm.xlu0 %262, %v223
  %v264 = vpop.permute.xlu0 %263
  %265 = vset.pattern.permute.xlu0 0
  %266 = vperm.xlu0 %265, %v224
  %v267 = vpop.permute.xlu0 %266
  %268 = vset.pattern.permute.xlu0 0
  %269 = vperm.xlu0 %268, %v225
  %v270 = vpop.permute.xlu0 %269
  %271 = vset.pattern.permute.xlu0 0
  %272 = vperm.xlu0 %271, %v226
  %v273 = vpop.permute.xlu0 %272
  %274 = vset.pattern.permute.xlu0 0
  %275 = vperm.xlu0 %274, %v227
  %v276 = vpop.permute.xlu0 %275
  %v277 = vlaneseq
  %v278 = vshrl.u32 %v277, 7
  %v279 = vsub.s32 0, %v278
  %v280 = vrot.slane %v228, %v279
  %v281 = vadd.s32 %v231, %v280
  %v282 = vadd.s32 %v234, %v280
  %v283 = vadd.s32 %v237, %v280
  %v284 = vadd.s32 %v240, %v280
  %v285 = vadd.s32 %v243, %v280
  %v286 = vadd.s32 %v246, %v280
  %v287 = vadd.s32 %v249, %v280
  %v288 = vadd.s32 %v252, %v280
  %v289 = vadd.s32 %v255, %v280
  %v290 = vadd.s32 %v258, %v280
  %v291 = vadd.s32 %v261, %v280
  %v292 = vadd.s32 %v264, %v280
  %v293 = vadd.s32 %v267, %v280
  %v294 = vadd.s32 %v270, %v280
  %v295 = vadd.s32 %v273, %v280
  %v296 = vadd.s32 %v276, %v280
  %vm297 = vcmp.ge.s32.totalorder %v196, 0
  %vm298 = vcmp.ge.s32.totalorder %v197, 0
  %vm299 = vcmp.ge.s32.totalorder %v198, 0
  %vm300 = vcmp.ge.s32.totalorder %v199, 0
  %vm301 = vcmp.ge.s32.totalorder %v200, 0
  %vm302 = vcmp.ge.s32.totalorder %v201, 0
  %vm303 = vcmp.ge.s32.totalorder %v202, 0
  %vm304 = vcmp.ge.s32.totalorder %v203, 0
  %vm305 = vcmp.ge.s32.totalorder %v204, 0
  %vm306 = vcmp.ge.s32.totalorder %v205, 0
  %vm307 = vcmp.ge.s32.totalorder %v206, 0
  %vm308 = vcmp.ge.s32.totalorder %v207, 0
  %vm309 = vcmp.ge.s32.totalorder %v208, 0
  %vm310 = vcmp.ge.s32.totalorder %v209, 0
  %vm311 = vcmp.ge.s32.totalorder %v210, 0
  %vm312 = vcmp.ge.s32.totalorder %v211, 0
  %vm313 = vcmp.lt.s32.totalorder %v196, 16
  %vm314 = vcmp.lt.s32.totalorder %v197, 16
  %vm315 = vcmp.lt.s32.totalorder %v198, 16
  %vm316 = vcmp.lt.s32.totalorder %v199, 16
  %vm317 = vcmp.lt.s32.totalorder %v200, 16
  %vm318 = vcmp.lt.s32.totalorder %v201, 16
  %vm319 = vcmp.lt.s32.totalorder %v202, 16
  %vm320 = vcmp.lt.s32.totalorder %v203, 16
  %vm321 = vcmp.lt.s32.totalorder %v204, 16
  %vm322 = vcmp.lt.s32.totalorder %v205, 16
  %vm323 = vcmp.lt.s32.totalorder %v206, 16
  %vm324 = vcmp.lt.s32.totalorder %v207, 16
  %vm325 = vcmp.lt.s32.totalorder %v208, 16
  %vm326 = vcmp.lt.s32.totalorder %v209, 16
  %vm327 = vcmp.lt.s32.totalorder %v210, 16
  %vm328 = vcmp.lt.s32.totalorder %v211, 16
  %vm329 = vmand %vm297, %vm313
  %vm330 = vmand %vm298, %vm314
  %vm331 = vmand %vm299, %vm315
  %vm332 = vmand %vm300, %vm316
  %vm333 = vmand %vm301, %vm317
  %vm334 = vmand %vm302, %vm318
  %vm335 = vmand %vm303, %vm319
  %vm336 = vmand %vm304, %vm320
  %vm337 = vmand %vm305, %vm321
  %vm338 = vmand %vm306, %vm322
  %vm339 = vmand %vm307, %vm323
  %vm340 = vmand %vm308, %vm324
  %vm341 = vmand %vm309, %vm325
  %vm342 = vmand %vm310, %vm326
  %vm343 = vmand %vm311, %vm327
  %vm344 = vmand %vm312, %vm328
  %vm345 = vcmp.ge.s32.totalorder %v281, 0
  %vm346 = vcmp.ge.s32.totalorder %v282, 0
  %vm347 = vcmp.ge.s32.totalorder %v283, 0
  %vm348 = vcmp.ge.s32.totalorder %v284, 0
  %vm349 = vcmp.ge.s32.totalorder %v285, 0
  %vm350 = vcmp.ge.s32.totalorder %v286, 0
  %vm351 = vcmp.ge.s32.totalorder %v287, 0
  %vm352 = vcmp.ge.s32.totalorder %v288, 0
  %vm353 = vcmp.ge.s32.totalorder %v289, 0
  %vm354 = vcmp.ge.s32.totalorder %v290, 0
  %vm355 = vcmp.ge.s32.totalorder %v291, 0
  %vm356 = vcmp.ge.s32.totalorder %v292, 0
  %vm357 = vcmp.ge.s32.totalorder %v293, 0
  %vm358 = vcmp.ge.s32.totalorder %v294, 0
  %vm359 = vcmp.ge.s32.totalorder %v295, 0
  %vm360 = vcmp.ge.s32.totalorder %v296, 0
  %vm361 = vmand %vm329, %vm345
  %vm362 = vmand %vm330, %vm346
  %vm363 = vmand %vm331, %vm347
  %vm364 = vmand %vm332, %vm348
  %vm365 = vmand %vm333, %vm349
  %vm366 = vmand %vm334, %vm350
  %vm367 = vmand %vm335, %vm351
  %vm368 = vmand %vm336, %vm352
  %vm369 = vmand %vm337, %vm353
  %vm370 = vmand %vm338, %vm354
  %vm371 = vmand %vm339, %vm355
  %vm372 = vmand %vm340, %vm356
  %vm373 = vmand %vm341, %vm357
  %vm374 = vmand %vm342, %vm358
  %vm375 = vmand %vm343, %vm359
  %vm376 = vmand %vm344, %vm360
  %vm377 = vcmp.lt.s32.totalorder %v281, 16
  %vm378 = vcmp.lt.s32.totalorder %v282, 16
  %vm379 = vcmp.lt.s32.totalorder %v283, 16
  %vm380 = vcmp.lt.s32.totalorder %v284, 16
  %vm381 = vcmp.lt.s32.totalorder %v285, 16
  %vm382 = vcmp.lt.s32.totalorder %v286, 16
  %vm383 = vcmp.lt.s32.totalorder %v287, 16
  %vm384 = vcmp.lt.s32.totalorder %v288, 16
  %vm385 = vcmp.lt.s32.totalorder %v289, 16
  %vm386 = vcmp.lt.s32.totalorder %v290, 16
  %vm387 = vcmp.lt.s32.totalorder %v291, 16
  %vm388 = vcmp.lt.s32.totalorder %v292, 16
  %vm389 = vcmp.lt.s32.totalorder %v293, 16
  %vm390 = vcmp.lt.s32.totalorder %v294, 16
  %vm391 = vcmp.lt.s32.totalorder %v295, 16
  %vm392 = vcmp.lt.s32.totalorder %v296, 16
  %vm393 = vmand %vm361, %vm377
  %vm394 = vmand %vm362, %vm378
  %vm395 = vmand %vm363, %vm379
  %vm396 = vmand %vm364, %vm380
  %vm397 = vmand %vm365, %vm381
  %vm398 = vmand %vm366, %vm382
  %vm399 = vmand %vm367, %vm383
  %vm400 = vmand %vm368, %vm384
  %vm401 = vmand %vm369, %vm385
  %vm402 = vmand %vm370, %vm386
  %vm403 = vmand %vm371, %vm387
  %vm404 = vmand %vm372, %vm388
  %vm405 = vmand %vm373, %vm389
  %vm406 = vmand %vm374, %vm390
  %vm407 = vmand %vm375, %vm391
  %vm408 = vmand %vm376, %vm392
  %v409 = vsel %vm393, %v111, 0.0
  %v410 = vsel %vm394, %v112, 0.0
  %v411 = vsel %vm395, %v113, 0.0
  %v412 = vsel %vm396, %v114, 0.0
  %v413 = vsel %vm397, %v115, 0.0
  %v414 = vsel %vm398, %v116, 0.0
  %v415 = vsel %vm399, %v117, 0.0
  %v416 = vsel %vm400, %v118, 0.0
  %v417 = vsel %vm401, %v119, 0.0
  %v418 = vsel %vm402, %v120, 0.0
  %v419 = vsel %vm403, %v121, 0.0
  %v420 = vsel %vm404, %v122, 0.0
  %v421 = vsel %vm405, %v123, 0.0
  %v422 = vsel %vm406, %v124, 0.0
  %v423 = vsel %vm407, %v125, 0.0
  %v424 = vsel %vm408, %v126, 0.0
  %v425 = vpack.c.bf16 %v410, %v409
  %v426 = vpack.c.bf16 %v412, %v411
  %v427 = vpack.c.bf16 %v414, %v413
  %v428 = vpack.c.bf16 %v416, %v415
  %v429 = vpack.c.bf16 %v418, %v417
  %v430 = vpack.c.bf16 %v420, %v419
  %v431 = vpack.c.bf16 %v422, %v421
  %v432 = vpack.c.bf16 %v424, %v423
  %v433 = vld [vmem:[%s7] sm:$0xf]
  %v434 = vld [vmem:[%s7 + $0x4] sm:$0xf]
  %v435 = vld [vmem:[%s7 + $0x8] sm:$0xf]
  %v436 = vld [vmem:[%s7 + $0xc] sm:$0xf]
  %v437 = vld [vmem:[%s7 + $0x10] sm:$0x3]
  %v438 = vld [vmem:[%s8] sm:$0x1]
  %v440 = vlaneseq
  %v441 = vshrl.u32 %v440, 7
  %v442 = vsub.s32 0, %v441
  %v443 = vrot.slane %v438, %v442
  %v450 = vunpack.c.l.b16 %v433
  %v451 = vunpack.c.l.b16 %v434
  %v452 = vunpack.c.l.b16 %v435
  %v453 = vunpack.c.l.b16 %v436
  %v454 = vunpack.c.l.b16 %v437
  %v455 = vpack.c.b16 %v451, %v450
  %v456 = vpack.c.b16 %v453, %v452
  %v457 = vpack.c.b16 %v454, %v454
  %vm460 = vcmask 293888
  %v462 = vsel %vm460, %v425, 0
  %v465 = vsel %vm460, %v426, 0
  %v468 = vsel %vm460, %v427, 0
  %v471 = vsel %vm460, %v428, 0
  %v474 = vsel %vm460, %v429, 0
  %v477 = vsel %vm460, %v430, 0
  %v480 = vsel %vm460, %v431, 0
  %v483 = vsel %vm460, %v432, 0
  %vm485 = vcmask 1041408
  %v487 = vsel %vm485, %v457, 0
  %489 = vmatprep.subr.bf16.mxu0 0
  %490 = vmatpush1.bf16.msra.mxu0 %v455
  %491 = vmatprep.subr.bf16.mxu0 0
  %492 = vmatpush1.bf16.msra.mxu0 %v456
  %493 = vmatprep.subr.bf16.mxu0 0
  %494 = vmatpush1.bf16.msra.mxu0 %v487
  %495 = vmatprep.subr.bf16.mxu0 0
  %496 = vmatpush1.bf16.msra.mxu0 0
  %497 = vmatprep.subr.bf16.mxu0 0
  %498 = vmatpush1.bf16.msra.mxu0 0
  %499 = vmatprep.subr.bf16.mxu0 0
  %500 = vmatpush1.bf16.msra.mxu0 0
  %501 = vmatprep.subr.bf16.mxu0 0
  %502 = vmatpush1.bf16.msra.mxu0 0
  %503 = vmatprep.subr.bf16.mxu0 0
  %504 = vmatpush1.bf16.msra.mxu0 0
  %505 = vmatprep.subr.bf16.mxu0 0
  %506 = vmatpush1.bf16.msra.mxu0 0
  %507 = vmatprep.subr.bf16.mxu0 0
  %508 = vmatpush1.bf16.msra.mxu0 0
  %509 = vmatprep.subr.bf16.mxu0 0
  %510 = vmatpush1.bf16.msra.mxu0 0
  %511 = vmatprep.subr.bf16.mxu0 0
  %512 = vmatpush1.bf16.msra.mxu0 0
  %513 = vmatprep.subr.bf16.mxu0 0
  %514 = vmatpush1.bf16.msra.mxu0 0
  %515 = vmatprep.subr.bf16.mxu0 0
  %516 = vmatpush1.bf16.msra.mxu0 0
  %517 = vmatprep.subr.bf16.mxu0 0
  %518 = vmatpush1.bf16.msra.mxu0 0
  %519 = vmatprep.subr.bf16.mxu0 0
  %520 = vmatpush1.bf16.msra.mxu0 0
  %521 = vmatprep.mubr.bf16.mxu0 0
  %522 = vmatmul.mubr.bf16.gmra.mrb[0].mxu0 %v462
  %v523 = vpop.f32.mrb[0].mxu0
  %v524 = vadd.f32 %v443, %v523
  %v525 = vpop.f32.mrb[0].mxu0
  %v526 = vpop.f32.mrb[0].mxu0
  %v527 = vadd.f32 %v443, %v526
  %v528 = vpop.f32.mrb[0].mxu0
  %529 = vmatprep.mubr.bf16.mxu0 0
  %530 = vmatmul.mubr.bf16.gmra.mrb[0].mxu0 %v465
  %v531 = vpop.f32.mrb[0].mxu0
  %v532 = vadd.f32 %v443, %v531
  %v533 = vpop.f32.mrb[0].mxu0
  %v534 = vpop.f32.mrb[0].mxu0
  %v535 = vadd.f32 %v443, %v534
  %v536 = vpop.f32.mrb[0].mxu0
  %537 = vmatprep.mubr.bf16.mxu0 0
  %538 = vmatmul.mubr.bf16.gmra.mrb[0].mxu0 %v468
  %v539 = vpop.f32.mrb[0].mxu0
  %v540 = vadd.f32 %v443, %v539
  %v541 = vpop.f32.mrb[0].mxu0
  %v542 = vpop.f32.mrb[0].mxu0
  %v543 = vadd.f32 %v443, %v542
  %v544 = vpop.f32.mrb[0].mxu0
  %545 = vmatprep.mubr.bf16.mxu0 0
  %546 = vmatmul.mubr.bf16.gmra.mrb[0].mxu0 %v471
  %v547 = vpop.f32.mrb[0].mxu0
  %v548 = vadd.f32 %v443, %v547
  %v549 = vpop.f32.mrb[0].mxu0
  %v550 = vpop.f32.mrb[0].mxu0
  %v551 = vadd.f32 %v443, %v550
  %v552 = vpop.f32.mrb[0].mxu0
  %553 = vmatprep.mubr.bf16.mxu0 0
  %554 = vmatmul.mubr.bf16.gmra.mrb[0].mxu0 %v474
  %v555 = vpop.f32.mrb[0].mxu0
  %v556 = vadd.f32 %v443, %v555
  %v557 = vpop.f32.mrb[0].mxu0
  %v558 = vpop.f32.mrb[0].mxu0
  %v559 = vadd.f32 %v443, %v558
  %v560 = vpop.f32.mrb[0].mxu0
  %561 = vmatprep.mubr.bf16.mxu0 0
  %562 = vmatmul.mubr.bf16.gmra.mrb[0].mxu0 %v477
  %v563 = vpop.f32.mrb[0].mxu0
  %v564 = vadd.f32 %v443, %v563
  %v565 = vpop.f32.mrb[0].mxu0
  %v566 = vpop.f32.mrb[0].mxu0
  %v567 = vadd.f32 %v443, %v566
  %v568 = vpop.f32.mrb[0].mxu0
  %569 = vmatprep.mubr.bf16.mxu0 0
  %570 = vmatmul.mubr.bf16.gmra.mrb[0].mxu0 %v480
  %v571 = vpop.f32.mrb[0].mxu0
  %v572 = vadd.f32 %v443, %v571
  %v573 = vpop.f32.mrb[0].mxu0
  %v574 = vpop.f32.mrb[0].mxu0
  %v575 = vadd.f32 %v443, %v574
  %v576 = vpop.f32.mrb[0].mxu0
  %577 = vmatprep.mubr.bf16.mxu0 0
  %578 = vmatmul.mubr.bf16.gmra.mrb[0].mxu0 %v483
  %v579 = vpop.f32.mrb[0].mxu0
  %v580 = vadd.f32 %v443, %v579
  %v581 = vpop.f32.mrb[0].mxu0
  %v582 = vpop.f32.mrb[0].mxu0
  %v583 = vadd.f32 %v443, %v582
  %v584 = vpop.f32.mrb[0].mxu0
  %585 = vdwg.mxu0
  %v586 = vmax.f32 %v524, 0.0
  %v587 = vmax.f32 %v527, 0.0
  %v588 = vmax.f32 %v532, 0.0
  %v589 = vmax.f32 %v535, 0.0
  %v590 = vmax.f32 %v540, 0.0
  %v591 = vmax.f32 %v543, 0.0
  %v592 = vmax.f32 %v548, 0.0
  %v593 = vmax.f32 %v551, 0.0
  %v594 = vmax.f32 %v556, 0.0
  %v595 = vmax.f32 %v559, 0.0
  %v596 = vmax.f32 %v564, 0.0
  %v597 = vmax.f32 %v567, 0.0
  %v598 = vmax.f32 %v572, 0.0
  %v599 = vmax.f32 %v575, 0.0
  %v600 = vmax.f32 %v580, 0.0
  %v601 = vmax.f32 %v583, 0.0
  %v602 = vmin.f32 %v586, 6.0
  %v603 = vmin.f32 %v587, 6.0
  %v604 = vmin.f32 %v588, 6.0
  %v605 = vmin.f32 %v589, 6.0
  %v606 = vmin.f32 %v590, 6.0
  %v607 = vmin.f32 %v591, 6.0
  %v608 = vmin.f32 %v592, 6.0
  %v609 = vmin.f32 %v593, 6.0
  %v610 = vmin.f32 %v594, 6.0
  %v611 = vmin.f32 %v595, 6.0
  %v612 = vmin.f32 %v596, 6.0
  %v613 = vmin.f32 %v597, 6.0
  %v614 = vmin.f32 %v598, 6.0
  %v615 = vmin.f32 %v599, 6.0
  %v616 = vmin.f32 %v600, 6.0
  %v617 = vmin.f32 %v601, 6.0
  %v618 = vpack.c.bf16 %v603, %v602
  %v619 = vpack.c.bf16 %v605, %v604
  %v620 = vpack.c.bf16 %v607, %v606
  %v621 = vpack.c.bf16 %v609, %v608
  %v622 = vpack.c.bf16 %v611, %v610
  %v623 = vpack.c.bf16 %v613, %v612
  %v624 = vpack.c.bf16 %v615, %v614
  %v625 = vpack.c.bf16 %v617, %v616
  %v634 = vunpack.c.l.b16 %v618
  %v635 = vunpack.c.h.b16 %v618
  %v636 = vunpack.c.l.b16 %v619
  %v637 = vunpack.c.h.b16 %v619
  %v638 = vunpack.c.l.b16 %v620
  %v639 = vunpack.c.h.b16 %v620
  %v640 = vunpack.c.l.b16 %v621
  %v641 = vunpack.c.h.b16 %v621
  %v642 = vunpack.c.l.b16 %v622
  %v643 = vunpack.c.h.b16 %v622
  %v644 = vunpack.c.l.b16 %v623
  %v645 = vunpack.c.h.b16 %v623
  %v646 = vunpack.c.l.b16 %v624
  %v647 = vunpack.c.h.b16 %v624
  %v648 = vunpack.c.l.b16 %v625
  %v649 = vunpack.c.h.b16 %v625
  %v650 = vpack.c.b16 %v634, %v634
  %v651 = vpack.c.b16 %v635, %v635
  %v652 = vpack.c.b16 %v636, %v636
  %v653 = vpack.c.b16 %v637, %v637
  %v654 = vpack.c.b16 %v638, %v638
  %v655 = vpack.c.b16 %v639, %v639
  %v656 = vpack.c.b16 %v640, %v640
  %v657 = vpack.c.b16 %v641, %v641
  %v658 = vpack.c.b16 %v642, %v642
  %v659 = vpack.c.b16 %v643, %v643
  %v660 = vpack.c.b16 %v644, %v644
  %v661 = vpack.c.b16 %v645, %v645
  %v662 = vpack.c.b16 %v646, %v646
  %v663 = vpack.c.b16 %v647, %v647
  %v664 = vpack.c.b16 %v648, %v648
  %v665 = vpack.c.b16 %v649, %v649
  %vm682 = vcmask 60416
  %683 = vst.msk [vmem:[%s9] sm:$0xf] %vm682, %v650
  %684 = vst.msk [vmem:[%s9 + $0x4] sm:$0xf] %vm682, %v651
  %685 = vst.msk [vmem:[%s9 + $0x8] sm:$0xf] %vm682, %v652
  %686 = vst.msk [vmem:[%s9 + $0xc] sm:$0xf] %vm682, %v653
  %687 = vst.msk [vmem:[%s9 + $0x10] sm:$0xf] %vm682, %v654
  %688 = vst.msk [vmem:[%s9 + $0x14] sm:$0xf] %vm682, %v655
  %689 = vst.msk [vmem:[%s9 + $0x18] sm:$0xf] %vm682, %v656
  %690 = vst.msk [vmem:[%s9 + $0x1c] sm:$0xf] %vm682, %v657
  %691 = vst.msk [vmem:[%s9 + $0x20] sm:$0xf] %vm682, %v658
  %692 = vst.msk [vmem:[%s9 + $0x24] sm:$0xf] %vm682, %v659
  %693 = vst.msk [vmem:[%s9 + $0x28] sm:$0xf] %vm682, %v660
  %694 = vst.msk [vmem:[%s9 + $0x2c] sm:$0xf] %vm682, %v661
  %695 = vst.msk [vmem:[%s9 + $0x30] sm:$0xf] %vm682, %v662
  %696 = vst.msk [vmem:[%s9 + $0x34] sm:$0xf] %vm682, %v663
  %697 = vst.msk [vmem:[%s9 + $0x38] sm:$0xf] %vm682, %v664
  %698 = vst.msk [vmem:[%s9 + $0x3c] sm:$0xf] %vm682, %v665
  // Predicated region
  $region38: #{tpu_custom_call.1} parent=0 // pred_check
    _
  $region39: #{tpu_custom_call.1} parent=0 // pred_check_branch
    %700 = sbr.rel (0) target = $region41
  $region40: #{tpu_custom_call.1} parent=0 // pred_region
    _
  $region41: #{tpu_custom_call.1} parent=0 // pred_fallthru
    _
  // Predicated region
  $region42: #{tpu_custom_call.1} parent=0 // pred_check
    _
  $region43: #{tpu_custom_call.1} parent=0 // pred_check_branch
    %702 = sbr.rel (0) target = $region45
  $region44: #{tpu_custom_call.1} parent=0 // pred_region
    _
  $region45: #{tpu_custom_call.1} parent=0 // pred_fallthru
    _

</llo_original>
